<compile_context>
chip_gen: v5e
topology: v5e:2x2
jax: 0.10.0
libtpu: 0.0.40
codegen_flags: <defaults>
</compile_context>

<pallas_src>
import functools
import math

import jax
import jax.numpy as jnp
from jax.experimental import pallas as pl
from jax.experimental.pallas import tpu as pltpu


_HIDDEN = 64  # fixed by the module: layer_sizes = [input_dim, 64, latent_size]


def _round_up(x, m):
    return (x + m - 1) // m * m


def _encoder_z_kernel(x_ref, w1_ref, b1_ref, wh_ref, bh_ref, out_ref):
    # Feature encoder: Linear(input_dim -> 64) + LeakyReLU(0.2).
    # f32 accumulation on the MXU regardless of input dtype.
    z = jnp.dot(x_ref[...], w1_ref[...], preferred_element_type=jnp.float32)
    z = z + b1_ref[...]                       # (1, H) broadcast over batch tile
    z = jnp.maximum(z, 0.2 * z)               # LeakyReLU(0.2): single VPU max

    # Fused heads: one matmul against [H, 2L] = [mu | logvar].
    # 2L = 128 for latent_size=64 -> lane-dense, unmasked output stores.
    h = jnp.dot(z.astype(wh_ref.dtype), wh_ref[...],
                preferred_element_type=jnp.float32)
    h = h + bh_ref[...]
    out_ref[...] = h.astype(out_ref.dtype)


@functools.partial(jax.jit,
                   static_argnames=("batch_tile", "compute_dtype", "out_dtype"))
def encoder_z_forward(x, w1, b1, wmu, bmu, wlv, blv, *,
                      batch_tile=None, compute_dtype=None, out_dtype=None):
    """x: [B, D_in]; w1: [D_in, H]; b1: [1, H];
    wmu/wlv: [H, L]; bmu/blv: [1, L]  ->  (mu [B, L], logvar [B, L])."""
    B, D_in = x.shape
    H = w1.shape[1]
    L = wmu.shape[1]
    L2 = 2 * L

    if out_dtype is None:
        out_dtype = x.dtype

    # ---- head fusion (wrapper-side, cheap XLA concat) -----------------------
    w_head = jnp.concatenate([wmu, wlv], axis=1)    # [H, 2L]
    b_head = jnp.concatenate([bmu, blv], axis=1)    # [1, 2L]

    # Optional bf16 inputs for the scaled-up / bandwidth-bound regime.
    # Biases stay f32 (adds happen on the f32 accumulator; v5e has no bf16 VPU).
    if compute_dtype is not None:
        x = x.astype(compute_dtype)
        w1 = w1.astype(compute_dtype)
        w_head = w_head.astype(compute_dtype)

    # ---- batch tiling --------------------------------------------------------
    if batch_tile is None:
        if B <= 16:
            # Tiny batch: a single grid step, everything resident, no loop.
            batch_tile = B
        else:
            # >=2 grid steps so v7x's second TensorCore participates via the
            # "parallel" axis; cap at 512 rows to respect v7x's 64 MiB VMEM
            # (v5e/v6e comfortably absorb 512-row x/output tiles).
            batch_tile = min(512, _round_up(pl.cdiv(B, 2), 8))
    grid = (pl.cdiv(B, batch_tile),)

    # ---- VMEM budget / resident-block buffering ------------------------------
    w_itemsize = jnp.dtype(w1.dtype).itemsize
    weight_bytes = (D_in * H + H * L2) * w_itemsize + (H + L2) * 4
    big_weights = weight_bytes > (4 << 20)
    # Resident blocks never change block index; single-buffer them when large
    # so double-buffering doesn't blow the scoped VMEM limit at huge D_in.
    resident_kwargs = {"pipeline_mode": pl.Buffered(1)} if big_weights else {}

    x_tile_bytes = batch_tile * D_in * jnp.dtype(x.dtype).itemsize
    out_tile_bytes = batch_tile * L2 * jnp.dtype(out_dtype).itemsize
    vmem_est = (2 * (x_tile_bytes + out_tile_bytes)
                + (1 if big_weights else 2) * weight_bytes)

    compiler_kwargs = {"dimension_semantics": ("parallel",)}
    if vmem_est > (24 << 20):
        compiler_kwargs["vmem_limit_bytes"] = int(min(2 * vmem_est, 64 << 20))

    resident = lambda i: (0, 0)   # weights/biases: same block every step
    row_tile = lambda i: (i, 0)   # x / output: tiled over batch rows

    out = pl.pallas_call(
        _encoder_z_kernel,
        out_shape=jax.ShapeDtypeStruct((B, L2), out_dtype),   # [mu | logvar]
        grid_spec=pltpu.PrefetchScalarGridSpec(
            num_scalar_prefetch=0,
            grid=grid,
            in_specs=[
                pl.BlockSpec((batch_tile, D_in), row_tile),            # x
                pl.BlockSpec((D_in, H), resident, **resident_kwargs),  # W1
                pl.BlockSpec((1, H), resident, **resident_kwargs),     # b1
                pl.BlockSpec((H, L2), resident, **resident_kwargs),    # W_head
                pl.BlockSpec((1, L2), resident, **resident_kwargs),    # b_head
            ],
            out_specs=pl.BlockSpec((batch_tile, L2), row_tile),
        ),
        compiler_params=pltpu.CompilerParams(**compiler_kwargs),
    )(x, w1, b1, w_head, b_head)

    mu = out[:, :L]
    logvar = out[:, L:]
    return mu, logvar


def _xavier_uniform(key, shape, gain=0.5):
    # The module's weights_init uses nn.init.xavier_uniform_(weight, gain=0.5):
    # bound = gain * sqrt(6 / (fan_in + fan_out)); symmetric in fan_in/fan_out,
    # so storing [in, out] (transpose of PyTorch's [out, in]) gives same bound.
    fan_in, fan_out = shape
    bound = gain * math.sqrt(6.0 / (fan_in + fan_out))
    return jax.random.uniform(key, shape, jnp.float32, minval=-bound, maxval=bound)


def init_params(key, input_dim, latent_size):
    hidden = _HIDDEN
    k1, k2, k3 = jax.random.split(key, 3)
    w1 = _xavier_uniform(k1, (input_dim, hidden))
    b1 = jnp.zeros((1, hidden), jnp.float32)
    wmu = _xavier_uniform(k2, (hidden, latent_size))
    bmu = jnp.zeros((1, latent_size), jnp.float32)
    wlv = _xavier_uniform(k3, (hidden, latent_size))
    blv = jnp.zeros((1, latent_size), jnp.float32)
    return w1, b1, wmu, bmu, wlv, blv


if __name__ == "__main__":
    # Small shapes consistent with the module: batch=8, input_dim=32,
    # hidden=64 (fixed), latent_size=64.
    B, D_IN, LATENT = 8, 32, 64

    key = jax.random.PRNGKey(0)
    kx, kp = jax.random.split(key)
    x = jax.random.normal(kx, (B, D_IN), jnp.float32)
    w1, b1, wmu, bmu, wlv, blv = init_params(kp, D_IN, LATENT)

    mu, logvar = encoder_z_forward(x, w1, b1, wmu, bmu, wlv, blv)
    mu, logvar = jax.block_until_ready((mu, logvar))

    # Reference check in plain JAX (same math, f32 throughout).
    z_ref = x @ w1 + b1
    z_ref = jnp.where(z_ref > 0, z_ref, 0.2 * z_ref)
    mu_ref = z_ref @ wmu + bmu
    lv_ref = z_ref @ wlv + blv

    assert mu.shape == (B, LATENT) and logvar.shape == (B, LATENT)
    assert jnp.allclose(mu, mu_ref, atol=1e-5, rtol=1e-5)
    assert jnp.allclose(logvar, lv_ref, atol=1e-5, rtol=1e-5)

    print("KERNEL_OK")
</pallas_src>

<mosaic_0001>
module attributes {stable_mosaic.version = 11 : i64} {
  func.func @_encoder_z_kernel(%arg0: i32, %arg1: memref<8x32xf32, #tpu.memory_space<vmem>>, %arg2: memref<32x64xf32, #tpu.memory_space<vmem>>, %arg3: memref<1x64xf32, #tpu.memory_space<vmem>>, %arg4: memref<64x128xf32, #tpu.memory_space<vmem>>, %arg5: memref<1x128xf32, #tpu.memory_space<vmem>>, %arg6: memref<8x128xf32, #tpu.memory_space<vmem>>) attributes {dimension_semantics = [#tpu.dimension_semantics<parallel>], iteration_bounds = array<i64: 1>, scalar_prefetch = 0 : i64, scratch_operands = 0 : i64, tpu.core_type = #tpu.core_type<tc>, window_params = [{transform_indices = @transform_0, window_bounds = array<i64: 8, 32>}, {pipeline_mode = #tpu.pipeline_mode<synchronous>, transform_indices = @transform_1, window_bounds = array<i64: 32, 64>}, {pipeline_mode = #tpu.pipeline_mode<synchronous>, transform_indices = @transform_2, window_bounds = array<i64: 1, 64>}, {pipeline_mode = #tpu.pipeline_mode<synchronous>, transform_indices = @transform_3, window_bounds = array<i64: 64, 128>}, {pipeline_mode = #tpu.pipeline_mode<synchronous>, transform_indices = @transform_4, window_bounds = array<i64: 1, 128>}, {transform_indices = @transform_5, window_bounds = array<i64: 8, 128>}]} {
    %c0 = arith.constant 0 : index
    %c0_0 = arith.constant 0 : index
    %0 = vector.load %arg1[%c0, %c0_0] : memref<8x32xf32, #tpu.memory_space<vmem>>, vector<8x32xf32>
    %c0_1 = arith.constant 0 : index
    %c0_2 = arith.constant 0 : index
    %1 = vector.load %arg2[%c0_1, %c0_2] : memref<32x64xf32, #tpu.memory_space<vmem>>, vector<32x64xf32>
    %cst = arith.constant dense<0.000000e+00> : vector<8x64xf32>
    %2 = tpu.matmul %0, %1, %cst {dimension_numbers = #tpu.dot_dimension_numbers<[1], [0], [0], [1], [0, 0, 1, 1], [], []>} : vector<8x32xf32>, vector<32x64xf32>, vector<8x64xf32> -> vector<8x64xf32>
    %c0_3 = arith.constant 0 : index
    %c0_4 = arith.constant 0 : index
    %3 = vector.load %arg3[%c0_3, %c0_4] : memref<1x64xf32, #tpu.memory_space<vmem>>, vector<1x64xf32>
    %4 = vector.broadcast %3 : vector<1x64xf32> to vector<8x64xf32>
    %5 = arith.addf %2, %4 : vector<8x64xf32>
    %cst_5 = arith.constant 2.000000e-01 : f32
    %6 = vector.broadcast %cst_5 : f32 to vector<8x64xf32>
    %7 = arith.mulf %6, %5 : vector<8x64xf32>
    %8 = arith.maximumf %5, %7 : vector<8x64xf32>
    %c0_6 = arith.constant 0 : index
    %c0_7 = arith.constant 0 : index
    %9 = vector.load %arg4[%c0_6, %c0_7] : memref<64x128xf32, #tpu.memory_space<vmem>>, vector<64x128xf32>
    %cst_8 = arith.constant dense<0.000000e+00> : vector<8x128xf32>
    %10 = tpu.matmul %8, %9, %cst_8 {dimension_numbers = #tpu.dot_dimension_numbers<[1], [0], [0], [1], [0, 0, 1, 1], [], []>} : vector<8x64xf32>, vector<64x128xf32>, vector<8x128xf32> -> vector<8x128xf32>
    %c0_9 = arith.constant 0 : index
    %c0_10 = arith.constant 0 : index
    %11 = vector.load %arg5[%c0_9, %c0_10] : memref<1x128xf32, #tpu.memory_space<vmem>>, vector<1x128xf32>
    %12 = vector.broadcast %11 : vector<1x128xf32> to vector<8x128xf32>
    %13 = arith.addf %10, %12 : vector<8x128xf32>
    %c0_11 = arith.constant 0 : index
    %c0_12 = arith.constant 0 : index
    %14 = vector.load %arg6[%c0_11, %c0_12] : memref<8x128xf32, #tpu.memory_space<vmem>>, vector<8x128xf32>
    tpu.vector_store %arg6[%c0_11, %c0_12], %13 {strides = array<i32>} : memref<8x128xf32, #tpu.memory_space<vmem>>, vector<8x128xf32>,
    return
  }
  func.func @transform_0(%arg0: i32) -> (i32, i32) {
    %c0_i32 = arith.constant 0 : i32
    %c0_i32_0 = arith.constant 0 : i32
    return %arg0, %c0_i32 : i32, i32
  }
  func.func @transform_1(%arg0: i32) -> (i32, i32) {
    %c0_i32 = arith.constant 0 : i32
    %c0_i32_0 = arith.constant 0 : i32
    %c0_i32_1 = arith.constant 0 : i32
    return %c0_i32, %c0_i32_0 : i32, i32
  }
  func.func @transform_2(%arg0: i32) -> (i32, i32) {
    %c0_i32 = arith.constant 0 : i32
    %c0_i32_0 = arith.constant 0 : i32
    %c0_i32_1 = arith.constant 0 : i32
    return %c0_i32, %c0_i32_0 : i32, i32
  }
  func.func @transform_3(%arg0: i32) -> (i32, i32) {
    %c0_i32 = arith.constant 0 : i32
    %c0_i32_0 = arith.constant 0 : i32
    %c0_i32_1 = arith.constant 0 : i32
    return %c0_i32, %c0_i32_0 : i32, i32
  }
  func.func @transform_4(%arg0: i32) -> (i32, i32) {
    %c0_i32 = arith.constant 0 : i32
    %c0_i32_0 = arith.constant 0 : i32
    %c0_i32_1 = arith.constant 0 : i32
    return %c0_i32, %c0_i32_0 : i32, i32
  }
  func.func @transform_5(%arg0: i32) -> (i32, i32) {
    %c0_i32 = arith.constant 0 : i32
    %c0_i32_0 = arith.constant 0 : i32
    return %arg0, %c0_i32 : i32, i32
  }
}

</mosaic_0001>

<llo_original>
// kernel: encoder_z_forward.1
$region0: #{encoder_z_forward.1}
  #allocation0 [shape = 'u32[]', space=smem, size = 0x4, offset = 0x4, fixed_abs, tag = 'smem constant byte address 0x4 - core index']
  #allocation1 [shape = 'u32[72,128]{1,0:T(1,128)}', space=vmem, size = 0x9000, scoped, tag = 'internal scratch']
  %s0 = inlined_call_operand.vmem [shape: f32[8,32], index: 0, kind: input, shape index: {}]
  %s1 = inlined_call_operand.vmem [shape: f32[32,64], index: 1, kind: input, shape index: {}]
  %s2 = inlined_call_operand.vmem [shape: f32[1,64], index: 2, kind: input, shape index: {}]
  %s3 = inlined_call_operand.vmem [shape: f32[64,128], index: 3, kind: input, shape index: {}]
  %s4 = inlined_call_operand.vmem [shape: f32[1,128], index: 4, kind: input, shape index: {}]
  %s5 = inlined_call_operand.vmem [shape: f32[8,128], index: 5, kind: output, shape index: {}]
  %s6 = sld [smem:[#allocation0]]
  $region30: #{encoder_z_forward.1} parent=0
    _
  %s8 = ssub.s32 1, %s6
  %s9 = scalar_select 0, %s8, %s6
  // Predicated region
  $region2: #{encoder_z_forward.1} parent=0 // pred_check
    _
  $region3: #{encoder_z_forward.1} parent=0 // pred_check_branch
    %11 = sbr.rel (0) target = $region5
  $region4: #{encoder_z_forward.1} parent=0 // pred_region
    _
  $region5: #{encoder_z_forward.1} parent=0 // pred_fallthru
    _
  // Predicated region
  $region6: #{encoder_z_forward.1} parent=0 // pred_check
    _
  $region7: #{encoder_z_forward.1} parent=0 // pred_check_branch
    %13 = sbr.rel (0) target = $region9
  $region8: #{encoder_z_forward.1} parent=0 // pred_region
    _
  $region9: #{encoder_z_forward.1} parent=0 // pred_fallthru
    _
  // Predicated region
  $region10: #{encoder_z_forward.1} parent=0 // pred_check
    _
  $region11: #{encoder_z_forward.1} parent=0 // pred_check_branch
    %15 = sbr.rel (0) target = $region13
  $region12: #{encoder_z_forward.1} parent=0 // pred_region
    _
  $region13: #{encoder_z_forward.1} parent=0 // pred_fallthru
    _
  // Predicated region
  $region14: #{encoder_z_forward.1} parent=0 // pred_check
    _
  $region15: #{encoder_z_forward.1} parent=0 // pred_check_branch
    %17 = sbr.rel (0) target = $region17
  $region16: #{encoder_z_forward.1} parent=0 // pred_region
    _
  $region17: #{encoder_z_forward.1} parent=0 // pred_fallthru
    _
  // Predicated region
  $region18: #{encoder_z_forward.1} parent=0 // pred_check
    _
  $region19: #{encoder_z_forward.1} parent=0 // pred_check_branch
    %19 = sbr.rel (0) target = $region21
  $region20: #{encoder_z_forward.1} parent=0 // pred_region
    _
  $region21: #{encoder_z_forward.1} parent=0 // pred_fallthru
    _
  %v20 = vld [vmem:[%s0] sm:$0xff]
  %v21 = vld [vmem:[%s1] sm:$0xff]
  %v22 = vld [vmem:[%s1 + $0x8] sm:$0xff]
  %v23 = vld [vmem:[%s1 + $0x10] sm:$0xff]
  %v24 = vld [vmem:[%s1 + $0x18] sm:$0xff]
  %v25 = vld [vmem:[%s2] sm:$0x1]
  %v27 = vperm.slane %v25, 0
  %vm29 = vcmask 261120
  %v31 = vsel %vm29, %v20, 0
  %33 = vmatpush.msra.mxu0 0.0
  %34 = vmatpush.msra.mxu0 0.0
  %35 = vmatpush.msra.mxu0 0.0
  %36 = vmatpush.msra.mxu0 0.0
  %37 = vmatpush.msra.mxu0 0.0
  %38 = vmatpush.msra.mxu0 0.0
  %39 = vmatpush.msra.mxu0 0.0
  %40 = vmatpush.msra.mxu0 0.0
  %41 = vmatpush.msra.mxu0 0.0
  %42 = vmatpush.msra.mxu0 0.0
  %43 = vmatpush.msra.mxu0 0.0
  %44 = vmatpush.msra.mxu0 0.0
  %45 = vmatpush.msra.mxu0 %v24
  %46 = vmatpush.msra.mxu0 %v23
  %47 = vmatpush.msra.mxu0 %v22
  %48 = vmatpush.msra.mxu0 %v21
  %49 = vmatmul.f32.gmra.mxu0 %v31
  %v50 = vpop.f32.mrf.mxu0
  %v51 = vadd.f32 %v27, %v50
  %52 = vdwg.mxu0
  %v53 = vmul.f32 %v51, 0.2
  %v54 = vmax.f32 %v51, %v53
  %v55 = vld [vmem:[%s3] sm:$0xff]
  %v56 = vld [vmem:[%s3 + $0x8] sm:$0xff]
  %v57 = vld [vmem:[%s3 + $0x10] sm:$0xff]
  %v58 = vld [vmem:[%s3 + $0x18] sm:$0xff]
  %v59 = vld [vmem:[%s3 + $0x20] sm:$0xff]
  %v60 = vld [vmem:[%s3 + $0x28] sm:$0xff]
  %v61 = vld [vmem:[%s3 + $0x30] sm:$0xff]
  %v62 = vld [vmem:[%s3 + $0x38] sm:$0xff]
  %v63 = vld [vmem:[%s4] sm:$0x1]
  %v65 = vperm.slane %v63, 0
  %vm67 = vcmask 523264
  %v69 = vsel %vm67, %v54, 0
  %71 = vmatpush.msra.mxu0 0.0
  %72 = vmatpush.msra.mxu0 0.0
  %73 = vmatpush.msra.mxu0 0.0
  %74 = vmatpush.msra.mxu0 0.0
  %75 = vmatpush.msra.mxu0 0.0
  %76 = vmatpush.msra.mxu0 0.0
  %77 = vmatpush.msra.mxu0 0.0
  %78 = vmatpush.msra.mxu0 0.0
  %79 = vmatpush.msra.mxu0 %v62
  %80 = vmatpush.msra.mxu0 %v61
  %81 = vmatpush.msra.mxu0 %v60
  %82 = vmatpush.msra.mxu0 %v59
  %83 = vmatpush.msra.mxu0 %v58
  %84 = vmatpush.msra.mxu0 %v57
  %85 = vmatpush.msra.mxu0 %v56
  %86 = vmatpush.msra.mxu0 %v55
  %87 = vmatmul.f32.gmra.mxu0 %v69
  %v88 = vpop.f32.mrf.mxu0
  %v89 = vadd.f32 %v65, %v88
  %90 = vdwg.mxu0
  %91 = vst [vmem:[%s5] sm:$0xff] %v89
  // Predicated region
  $region22: #{encoder_z_forward.1} parent=0 // pred_check
    _
  $region23: #{encoder_z_forward.1} parent=0 // pred_check_branch
    %93 = sbr.rel (0) target = $region25
  $region24: #{encoder_z_forward.1} parent=0 // pred_region
    _
  $region25: #{encoder_z_forward.1} parent=0 // pred_fallthru
    _
  // Predicated region
  $region26: #{encoder_z_forward.1} parent=0 // pred_check
    _
  $region27: #{encoder_z_forward.1} parent=0 // pred_check_branch
    %95 = sbr.rel (0) target = $region29
  $region28: #{encoder_z_forward.1} parent=0 // pred_region
    _
  $region29: #{encoder_z_forward.1} parent=0 // pred_fallthru
    _

</llo_original>
